<compile_context>
chip_gen: v7x
topology: tpu7x:2x2x1
jax: 0.10.0
libtpu: 0.0.40
codegen_flags: <defaults>
</compile_context>

<pallas_src>
import jax
import jax.numpy as jnp
from jax import lax
from jax.experimental import pallas as pl
from jax.experimental.pallas import tpu as pltpu

LN_EPS = 1e-5          # torch.nn.LayerNorm default
LEAKY_SLOPE = 0.01     # torch.nn.LeakyyReLU default slope is 0.01
MATMUL_DTYPE = jnp.bfloat16   # MXU operand dtype (accumulation stays f32)

# ---- packed "small parameter" block layout: (VEC_ROWS, VEC_COLS) f32, zero padded
ROW_LN3_G, ROW_LN3_B = 0, 1   # (70,)  ln3 gamma / beta (kept separate: hn feeds residual)
ROW_B1A = 2                   # (200,) enc1 first bias  (LN1 beta folded in)
ROW_B2A = 3                   # (10,)  enc2 first bias  (LN2 beta folded in)
ROW_BCAT = 4                  # (70,)  [b1b | b2b] concat bias
ROW_BLA = 5                   # (70,)  last first bias
ROW_BLB = 6                   # (70,)  last second bias
ROW_BC = 7                    # (2,)   classifier bias
VEC_ROWS, VEC_COLS = 8, 256


def pair_mlp_kernel(emb_ref, pf_ref, vec_ref,
                    w1a_ref, w1b_ref, w2a_ref, w2b_ref,
                    wla_ref, wlb_ref, wc_ref,
                    out_ref):
    f32 = jnp.float32
    mm = w1a_ref.dtype                     # matmul operand dtype (bf16)

    vec = vec_ref[...]                     # (8, 256) f32 packed small params

    def row(r, w):
        return vec[r:r + 1, :w]            # (1, w) bias / LN-affine row

    def normalize(x):                      # LayerNorm without affine (affine folded)
        mu = jnp.mean(x, axis=-1, keepdims=True)
        var = jnp.mean(jnp.square(x - mu), axis=-1, keepdims=True)
        return (x - mu) * lax.rsqrt(var + LN_EPS)

    emb = emb_ref[...].astype(f32)
    pf = pf_ref[...].astype(f32)

    # ----- branch 1: ln1(norm only) -> Linear(100,200) -> ReLU ------------------
    n1 = normalize(emb)
    t1 = jnp.dot(n1.astype(mm), w1a_ref[...],
                 preferred_element_type=f32) + row(ROW_B1A, 200)
    t1 = jnp.maximum(t1, 0.0)

    # ----- branch 2: ln2(norm only) -> Linear(4,10) -> LeakyReLU ----------------
    n2 = normalize(pf)
    z2 = jnp.dot(n2.astype(mm), w2a_ref[...],
                 preferred_element_type=f32) + row(ROW_B2A, 10)
    t2 = jnp.where(z2 >= 0.0, z2, LEAKY_SLOPE * z2)

    # ----- concat-in-MXU: h = cat(enc1_out, enc2_out) built by zero-padded dots --
    h = (jnp.dot(t1.astype(mm), w1b_ref[...], preferred_element_type=f32)
         + jnp.dot(t2.astype(mm), w2b_ref[...], preferred_element_type=f32)
         + row(ROW_BCAT, 70))

    # ----- ln3 (single standard LayerNorm over the fused (TB,70) h) -------------
    hn = normalize(h) * row(ROW_LN3_G, 70) + row(ROW_LN3_B, 70)

    # ----- last: Linear(70,70) -> ReLU -> Linear(70,70), residual ---------------
    tl = jnp.dot(hn.astype(mm), wla_ref[...],
                 preferred_element_type=f32) + row(ROW_BLA, 70)
    tl = jnp.maximum(tl, 0.0)
    last = jnp.dot(tl.astype(mm), wlb_ref[...],
                   preferred_element_type=f32) + row(ROW_BLB, 70) + hn

    # ----- classifier on relu(last) ----------------------------------------------
    y = jnp.dot(jnp.maximum(last, 0.0).astype(mm), wc_ref[...],
                preferred_element_type=f32) + row(ROW_BC, 2)
    out_ref[...] = y.astype(out_ref.dtype)


def init_params(key):
    """Deterministic synthetic parameters matching Pair_mlp shapes (f32)."""
    ks = list(jax.random.split(key, 20))

    def lin(kw, kb, fin, fout, scale):
        w = jax.random.normal(kw, (fin, fout), jnp.float32) * scale  # [in, out]
        b = jax.random.normal(kb, (1, fout), jnp.float32) * 0.01
        return w, b

    params = {}
    params["ln1_g"] = 1.0 + 0.05 * jax.random.normal(ks[0], (1, 100), jnp.float32)
    params["ln1_b"] = 0.05 * jax.random.normal(ks[1], (1, 100), jnp.float32)
    params["ln2_g"] = 1.0 + 0.05 * jax.random.normal(ks[2], (1, 4), jnp.float32)
    params["ln2_b"] = 0.05 * jax.random.normal(ks[3], (1, 4), jnp.float32)
    params["ln3_g"] = 1.0 + 0.05 * jax.random.normal(ks[4], (1, 70), jnp.float32)
    params["ln3_b"] = 0.05 * jax.random.normal(ks[5], (1, 70), jnp.float32)
    params["w1a"], params["b1a"] = lin(ks[6], ks[7], 100, 200, 0.1)
    params["w1b"], params["b1b"] = lin(ks[8], ks[9], 200, 50, 0.1)
    params["w2a"], params["b2a"] = lin(ks[10], ks[11], 4, 10, 0.3)
    params["w2b"], params["b2b"] = lin(ks[12], ks[13], 10, 20, 0.3)
    params["wla"], params["bla"] = lin(ks[14], ks[15], 70, 70, 0.1)
    params["wlb"], params["blb"] = lin(ks[16], ks[17], 70, 70, 0.1)
    params["wc"], params["bc"] = lin(ks[18], ks[19], 70, 2, 0.1)
    return params


def pack_params(params, matmul_dtype=MATMUL_DTYPE):
    """Fold LN1/LN2 affines into the first-layer weights, build the zero-padded
    concat weights, pack small params into one f32 block, cast MXU weights to bf16."""
    f32 = jnp.float32
    g1 = jnp.asarray(params["ln1_g"], f32).reshape(1, 100)
    b1 = jnp.asarray(params["ln1_b"], f32).reshape(1, 100)
    g2 = jnp.asarray(params["ln2_g"], f32).reshape(1, 4)
    b2 = jnp.asarray(params["ln2_b"], f32).reshape(1, 4)
    w1a = jnp.asarray(params["w1a"], f32)          # (100, 200)
    w2a = jnp.asarray(params["w2a"], f32)          # (4, 10)

    # fold LN affine into the first dot of each branch (safe: x1/x2 feed only the dot)
    w1a_f = g1.T * w1a                              # diag(gamma1) @ w1a
    b1a_f = jnp.asarray(params["b1a"], f32) + b1 @ w1a
    w2a_f = g2.T * w2a
    b2a_f = jnp.asarray(params["b2a"], f32) + b2 @ w2a

    # concat-in-MXU: zero-pad second-layer weights to 70 output columns
    w1b_pad = jnp.zeros((200, 70), f32).at[:, :50].set(jnp.asarray(params["w1b"], f32))
    w2b_pad = jnp.zeros((10, 70), f32).at[:, 50:].set(jnp.asarray(params["w2b"], f32))
    b_cat = jnp.concatenate([jnp.asarray(params["b1b"], f32),
                             jnp.asarray(params["b2b"], f32)], axis=-1)   # (1, 70)

    vec = jnp.zeros((VEC_ROWS, VEC_COLS), f32)

    def put(v, r, val):
        val = jnp.asarray(val, f32)
        if val.ndim == 1:
            val = val[None, :]
        return v.at[r:r + 1, :val.shape[1]].set(val)

    vec = put(vec, ROW_LN3_G, params["ln3_g"])
    vec = put(vec, ROW_LN3_B, params["ln3_b"])
    vec = put(vec, ROW_B1A, b1a_f)
    vec = put(vec, ROW_B2A, b2a_f)
    vec = put(vec, ROW_BCAT, b_cat)
    vec = put(vec, ROW_BLA, params["bla"])
    vec = put(vec, ROW_BLB, params["blb"])
    vec = put(vec, ROW_BC, params["bc"])

    cast = lambda w: jnp.asarray(w, f32).astype(matmul_dtype)
    return dict(
        vec=vec,
        w1a=cast(w1a_f), w1b=cast(w1b_pad),          # zero pad columns stay exactly 0 in bf16
        w2a=cast(w2a_f), w2b=cast(w2b_pad),
        wla=cast(params["wla"]), wlb=cast(params["wlb"]), wc=cast(params["wc"]),
    )


PACKED_ORDER = ["vec", "w1a", "w1b", "w2a", "w2b", "wla", "wlb", "wc"]


def _round_up(x, m):
    return (x + m - 1) // m * m


def pair_mlp_forward(embedding, pair_feats, packed, *, batch_tile=256, target_tiles=4):
    B = embedding.shape[0]
    # Pick TB so the grid has ~target_tiles steps (DMA/compute overlap, dual-TC on v7x),
    # capped at batch_tile and sublane-aligned to 8.  Keeps zero-padding waste bounded.
    tb_for_tiles = _round_up(pl.cdiv(B, target_tiles), 8)
    TB = max(8, min(_round_up(batch_tile, 8), tb_for_tiles))
    num_tiles = pl.cdiv(B, TB)
    B_pad = num_tiles * TB
    if B_pad != B:
        embedding = jnp.pad(embedding, ((0, B_pad - B), (0, 0)))
        pair_feats = jnp.pad(pair_feats, ((0, B_pad - B), (0, 0)))

    plist = [packed[name] for name in PACKED_ORDER]

    in_specs = [
        pl.BlockSpec((TB, 100), lambda i: (i, 0)),   # embedding tile (pipelined)
        pl.BlockSpec((TB, 4), lambda i: (i, 0)),     # pair_feats tile
    ]
    # parameters: whole array, same block every grid step (stay VMEM-resident)
    in_specs += [pl.BlockSpec(p.shape, lambda i: (0, 0)) for p in plist]

    flops_per_row = 2 * (100 * 200 + 200 * 70 + 4 * 10 + 10 * 70
                         + 70 * 70 + 70 * 70 + 70 * 2)
    param_bytes = sum(int(p.size) * p.dtype.itemsize for p in plist)
    bytes_accessed = int(B_pad) * (100 + 4 + 2) * 4 + param_bytes

    y = pl.pallas_call(
        pair_mlp_kernel,
        out_shape=jax.ShapeDtypeStruct((B_pad, 2), jnp.float32),
        grid=(num_tiles,),
        in_specs=in_specs,
        out_specs=pl.BlockSpec((TB, 2), lambda i: (i, 0)),
        compiler_params=pltpu.CompilerParams(
            dimension_semantics=("parallel",)),      # batch tiles independent (dual TC on v7x)
        cost_estimate=pl.CostEstimate(
            flops=int(B_pad) * flops_per_row,
            transcendentals=3 * int(B_pad),
            bytes_accessed=int(bytes_accessed)),
    )(embedding, pair_feats, *plist)
    return y[:B]


def pair_mlp_reference(embedding, pair_feats, params):
    """Pure-f32 JAX reference mirroring the PyTorch forward exactly."""
    def layernorm(x, g, b):
        mu = jnp.mean(x, axis=-1, keepdims=True)
        var = jnp.mean(jnp.square(x - mu), axis=-1, keepdims=True)
        return (x - mu) * lax.rsqrt(var + LN_EPS) * g + b

    x1 = layernorm(embedding, params["ln1_g"], params["ln1_b"])
    t1 = jnp.maximum(x1 @ params["w1a"] + params["b1a"], 0.0)
    h1 = t1 @ params["w1b"] + params["b1b"]

    x2 = layernorm(pair_feats, params["ln2_g"], params["ln2_b"])
    z2 = x2 @ params["w2a"] + params["b2a"]
    t2 = jnp.where(z2 >= 0.0, z2, LEAKY_SLOPE * z2)
    h2 = t2 @ params["w2b"] + params["b2b"]

    h = jnp.concatenate([h1, h2], axis=-1)
    hn = layernorm(h, params["ln3_g"], params["ln3_b"])
    tl = jnp.maximum(hn @ params["wla"] + params["bla"], 0.0)
    last = tl @ params["wlb"] + params["blb"] + hn
    return jnp.maximum(last, 0.0) @ params["wc"] + params["bc"]


def pair_mlp_reference_packed(embedding, pair_feats, packed):
    """Mixed-precision XLA reference that mirrors the kernel math exactly
    (folded LN affines, zero-padded concat weights, bf16 operands, f32 accum)."""
    f32 = jnp.float32
    vec = packed["vec"]
    mm = packed["w1a"].dtype

    def row(r, w):
        return vec[r:r + 1, :w]

    def normalize(x):
        mu = jnp.mean(x, axis=-1, keepdims=True)
        var = jnp.mean(jnp.square(x - mu), axis=-1, keepdims=True)
        return (x - mu) * lax.rsqrt(var + LN_EPS)

    n1 = normalize(embedding.astype(f32))
    n2 = normalize(pair_feats.astype(f32))
    t1 = jnp.maximum(jnp.dot(n1.astype(mm), packed["w1a"],
                             preferred_element_type=f32) + row(ROW_B1A, 200), 0.0)
    z2 = jnp.dot(n2.astype(mm), packed["w2a"],
                 preferred_element_type=f32) + row(ROW_B2A, 10)
    t2 = jnp.where(z2 >= 0.0, z2, LEAKY_SLOPE * z2)
    h = (jnp.dot(t1.astype(mm), packed["w1b"], preferred_element_type=f32)
         + jnp.dot(t2.astype(mm), packed["w2b"], preferred_element_type=f32)
         + row(ROW_BCAT, 70))
    hn = normalize(h) * row(ROW_LN3_G, 70) + row(ROW_LN3_B, 70)
    tl = jnp.maximum(jnp.dot(hn.astype(mm), packed["wla"],
                             preferred_element_type=f32) + row(ROW_BLA, 70), 0.0)
    last = jnp.dot(tl.astype(mm), packed["wlb"],
                   preferred_element_type=f32) + row(ROW_BLB, 70) + hn
    return jnp.dot(jnp.maximum(last, 0.0).astype(mm), packed["wc"],
                   preferred_element_type=f32) + row(ROW_BC, 2)


if __name__ == "__main__":
    key = jax.random.PRNGKey(0)
    k_emb, k_pf, k_params = jax.random.split(key, 3)
    params = init_params(k_params)
    packed = pack_params(params)

    # --- small case (single tile) ---
    B = 8
    embedding = jax.random.normal(k_emb, (B, 100), jnp.float32)
    pair_feats = jax.random.normal(k_pf, (B, 4), jnp.float32)

    y = jax.block_until_ready(pair_mlp_forward(embedding, pair_feats, packed))
    assert y.shape == (B, 2) and y.dtype == jnp.float32

    y_mix = pair_mlp_reference_packed(embedding, pair_feats, packed)
    y_f32 = pair_mlp_reference(embedding, pair_feats, params)
    assert jnp.allclose(y, y_mix, atol=5e-3, rtol=5e-3), "mismatch vs kernel-mirror reference"
    assert jnp.allclose(y, y_f32, atol=6e-2, rtol=6e-2), "mismatch vs f32 reference"

    # --- larger case exercising batch tiling + padding (4 tiles of 256 rows) ---
    B2 = 1000
    k_e2, k_p2 = jax.random.split(jax.random.PRNGKey(1))
    emb2 = jax.random.normal(k_e2, (B2, 100), jnp.float32)
    pf2 = jax.random.normal(k_p2, (B2, 4), jnp.float32)
    y2 = jax.block_until_ready(pair_mlp_forward(emb2, pf2, packed))
    y2_mix = pair_mlp_reference_packed(emb2, pf2, packed)
    assert y2.shape == (B2, 2)
    assert jnp.allclose(y2, y2_mix, atol=5e-3, rtol=5e-3), "tiled-path mismatch vs reference"

    print("KERNEL_OK")
</pallas_src>

<mosaic_0001>
module attributes {stable_mosaic.version = 11 : i64} {
  func.func @pair_mlp_kernel(%arg0: i32, %arg1: memref<8x100xf32, #tpu.memory_space<vmem>>, %arg2: memref<8x4xf32, #tpu.memory_space<vmem>>, %arg3: memref<8x256xf32, #tpu.memory_space<vmem>>, %arg4: memref<100x200xbf16, #tpu.memory_space<vmem>>, %arg5: memref<200x70xbf16, #tpu.memory_space<vmem>>, %arg6: memref<4x10xbf16, #tpu.memory_space<vmem>>, %arg7: memref<10x70xbf16, #tpu.memory_space<vmem>>, %arg8: memref<70x70xbf16, #tpu.memory_space<vmem>>, %arg9: memref<70x70xbf16, #tpu.memory_space<vmem>>, %arg10: memref<70x2xbf16, #tpu.memory_space<vmem>>, %arg11: memref<8x2xf32, #tpu.memory_space<vmem>>) attributes {dimension_semantics = [#tpu.dimension_semantics<parallel>], iteration_bounds = array<i64: 1>, scalar_prefetch = 0 : i64, scratch_operands = 0 : i64, tpu.core_type = #tpu.core_type<tc>, window_params = [{transform_indices = @transform_0, window_bounds = array<i64: 8, 100>}, {transform_indices = @transform_1, window_bounds = array<i64: 8, 4>}, {pipeline_mode = #tpu.pipeline_mode<synchronous>, transform_indices = @transform_2, window_bounds = array<i64: 8, 256>}, {pipeline_mode = #tpu.pipeline_mode<synchronous>, transform_indices = @transform_3, window_bounds = array<i64: 100, 200>}, {pipeline_mode = #tpu.pipeline_mode<synchronous>, transform_indices = @transform_4, window_bounds = array<i64: 200, 70>}, {pipeline_mode = #tpu.pipeline_mode<synchronous>, transform_indices = @transform_5, window_bounds = array<i64: 4, 10>}, {pipeline_mode = #tpu.pipeline_mode<synchronous>, transform_indices = @transform_6, window_bounds = array<i64: 10, 70>}, {pipeline_mode = #tpu.pipeline_mode<synchronous>, transform_indices = @transform_7, window_bounds = array<i64: 70, 70>}, {pipeline_mode = #tpu.pipeline_mode<synchronous>, transform_indices = @transform_8, window_bounds = array<i64: 70, 70>}, {pipeline_mode = #tpu.pipeline_mode<synchronous>, transform_indices = @transform_9, window_bounds = array<i64: 70, 2>}, {transform_indices = @transform_10, window_bounds = array<i64: 8, 2>}]} {
    %c0 = arith.constant 0 : index
    %c0_0 = arith.constant 0 : index
    %0 = vector.load %arg3[%c0, %c0_0] : memref<8x256xf32, #tpu.memory_space<vmem>>, vector<8x256xf32>
    %c0_1 = arith.constant 0 : index
    %c0_2 = arith.constant 0 : index
    %1 = vector.load %arg1[%c0_1, %c0_2] : memref<8x100xf32, #tpu.memory_space<vmem>>, vector<8x100xf32>
    %c0_3 = arith.constant 0 : index
    %c0_4 = arith.constant 0 : index
    %2 = vector.load %arg2[%c0_3, %c0_4] : memref<8x4xf32, #tpu.memory_space<vmem>>, vector<8x4xf32>
    %cst = arith.constant dense<0.000000e+00> : vector<8xf32>
    %3 = vector.multi_reduction <add>, %1, %cst [1] : vector<8x100xf32> to vector<8xf32>
    %4 = vector.shape_cast %3 : vector<8xf32> to vector<8x1xf32>
    %cst_5 = arith.constant 1.000000e+02 : f32
    %5 = vector.broadcast %cst_5 : f32 to vector<8x1xf32>
    %6 = arith.divf %4, %5 : vector<8x1xf32>
    %7 = vector.broadcast %6 : vector<8x1xf32> to vector<8x100xf32>
    %8 = arith.subf %1, %7 : vector<8x100xf32>
    %9 = arith.mulf %8, %8 : vector<8x100xf32>
    %cst_6 = arith.constant dense<0.000000e+00> : vector<8xf32>
    %10 = vector.multi_reduction <add>, %9, %cst_6 [1] : vector<8x100xf32> to vector<8xf32>
    %11 = vector.shape_cast %10 : vector<8xf32> to vector<8x1xf32>
    %cst_7 = arith.constant 1.000000e+02 : f32
    %12 = vector.broadcast %cst_7 : f32 to vector<8x1xf32>
    %13 = arith.divf %11, %12 : vector<8x1xf32>
    %14 = vector.broadcast %6 : vector<8x1xf32> to vector<8x100xf32>
    %15 = arith.subf %1, %14 : vector<8x100xf32>
    %cst_8 = arith.constant 9.99999974E-6 : f32
    %16 = vector.broadcast %cst_8 : f32 to vector<8x1xf32>
    %17 = arith.addf %13, %16 : vector<8x1xf32>
    %18 = math.rsqrt %17 : vector<8x1xf32>
    %19 = vector.broadcast %18 : vector<8x1xf32> to vector<8x100xf32>
    %20 = arith.mulf %15, %19 : vector<8x100xf32>
    %21 = arith.truncf %20 : vector<8x100xf32> to vector<8x100xbf16>
    %c0_9 = arith.constant 0 : index
    %c0_10 = arith.constant 0 : index
    %22 = vector.load %arg4[%c0_9, %c0_10] : memref<100x200xbf16, #tpu.memory_space<vmem>>, vector<100x200xbf16>
    %cst_11 = arith.constant dense<0.000000e+00> : vector<8x200xf32>
    %23 = tpu.matmul %21, %22, %cst_11 {dimension_numbers = #tpu.dot_dimension_numbers<[1], [0], [0], [1], [0, 0, 1, 1], [], []>} : vector<8x100xbf16>, vector<100x200xbf16>, vector<8x200xf32> -> vector<8x200xf32>
    %24 = vector.extract_strided_slice %0 {offsets = [2, 0], sizes = [1, 200], strides = [1, 1]} : vector<8x256xf32> to vector<1x200xf32>
    %25 = vector.broadcast %24 : vector<1x200xf32> to vector<8x200xf32>
    %26 = arith.addf %23, %25 : vector<8x200xf32>
    %cst_12 = arith.constant 0.000000e+00 : f32
    %27 = vector.broadcast %cst_12 : f32 to vector<8x200xf32>
    %28 = arith.maximumf %26, %27 : vector<8x200xf32>
    %cst_13 = arith.constant dense<0.000000e+00> : vector<8xf32>
    %29 = vector.multi_reduction <add>, %2, %cst_13 [1] : vector<8x4xf32> to vector<8xf32>
    %30 = vector.shape_cast %29 : vector<8xf32> to vector<8x1xf32>
    %cst_14 = arith.constant 4.000000e+00 : f32
    %31 = vector.broadcast %cst_14 : f32 to vector<8x1xf32>
    %32 = arith.divf %30, %31 : vector<8x1xf32>
    %33 = vector.broadcast %32 : vector<8x1xf32> to vector<8x4xf32>
    %34 = arith.subf %2, %33 : vector<8x4xf32>
    %35 = arith.mulf %34, %34 : vector<8x4xf32>
    %cst_15 = arith.constant dense<0.000000e+00> : vector<8xf32>
    %36 = vector.multi_reduction <add>, %35, %cst_15 [1] : vector<8x4xf32> to vector<8xf32>
    %37 = vector.shape_cast %36 : vector<8xf32> to vector<8x1xf32>
    %cst_16 = arith.constant 4.000000e+00 : f32
    %38 = vector.broadcast %cst_16 : f32 to vector<8x1xf32>
    %39 = arith.divf %37, %38 : vector<8x1xf32>
    %40 = vector.broadcast %32 : vector<8x1xf32> to vector<8x4xf32>
    %41 = arith.subf %2, %40 : vector<8x4xf32>
    %cst_17 = arith.constant 9.99999974E-6 : f32
    %42 = vector.broadcast %cst_17 : f32 to vector<8x1xf32>
    %43 = arith.addf %39, %42 : vector<8x1xf32>
    %44 = math.rsqrt %43 : vector<8x1xf32>
    %45 = vector.broadcast %44 : vector<8x1xf32> to vector<8x4xf32>
    %46 = arith.mulf %41, %45 : vector<8x4xf32>
    %47 = arith.truncf %46 : vector<8x4xf32> to vector<8x4xbf16>
    %c0_18 = arith.constant 0 : index
    %c0_19 = arith.constant 0 : index
    %48 = vector.load %arg6[%c0_18, %c0_19] : memref<4x10xbf16, #tpu.memory_space<vmem>>, vector<4x10xbf16>
    %cst_20 = arith.constant dense<0.000000e+00> : vector<8x10xf32>
    %49 = tpu.matmul %47, %48, %cst_20 {dimension_numbers = #tpu.dot_dimension_numbers<[1], [0], [0], [1], [0, 0, 1, 1], [], []>} : vector<8x4xbf16>, vector<4x10xbf16>, vector<8x10xf32> -> vector<8x10xf32>
    %50 = vector.extract_strided_slice %0 {offsets = [3, 0], sizes = [1, 10], strides = [1, 1]} : vector<8x256xf32> to vector<1x10xf32>
    %51 = vector.broadcast %50 : vector<1x10xf32> to vector<8x10xf32>
    %52 = arith.addf %49, %51 : vector<8x10xf32>
    %cst_21 = arith.constant 0.000000e+00 : f32
    %53 = vector.broadcast %cst_21 : f32 to vector<8x10xf32>
    %54 = arith.cmpf oge, %52, %53 : vector<8x10xf32>
    %cst_22 = arith.constant 0.00999999977 : f32
    %55 = vector.broadcast %cst_22 : f32 to vector<8x10xf32>
    %56 = arith.mulf %55, %52 : vector<8x10xf32>
    %57 = arith.select %54, %52, %56 : vector<8x10xi1>, vector<8x10xf32>
    %58 = arith.truncf %28 : vector<8x200xf32> to vector<8x200xbf16>
    %c0_23 = arith.constant 0 : index
    %c0_24 = arith.constant 0 : index
    %59 = vector.load %arg5[%c0_23, %c0_24] : memref<200x70xbf16, #tpu.memory_space<vmem>>, vector<200x70xbf16>
    %cst_25 = arith.constant dense<0.000000e+00> : vector<8x70xf32>
    %60 = tpu.matmul %58, %59, %cst_25 {dimension_numbers = #tpu.dot_dimension_numbers<[1], [0], [0], [1], [0, 0, 1, 1], [], []>} : vector<8x200xbf16>, vector<200x70xbf16>, vector<8x70xf32> -> vector<8x70xf32>
    %61 = arith.truncf %57 : vector<8x10xf32> to vector<8x10xbf16>
    %c0_26 = arith.constant 0 : index
    %c0_27 = arith.constant 0 : index
    %62 = vector.load %arg7[%c0_26, %c0_27] : memref<10x70xbf16, #tpu.memory_space<vmem>>, vector<10x70xbf16>
    %cst_28 = arith.constant dense<0.000000e+00> : vector<8x70xf32>
    %63 = tpu.matmul %61, %62, %cst_28 {dimension_numbers = #tpu.dot_dimension_numbers<[1], [0], [0], [1], [0, 0, 1, 1], [], []>} : vector<8x10xbf16>, vector<10x70xbf16>, vector<8x70xf32> -> vector<8x70xf32>
    %64 = arith.addf %60, %63 : vector<8x70xf32>
    %65 = vector.extract_strided_slice %0 {offsets = [4, 0], sizes = [1, 70], strides = [1, 1]} : vector<8x256xf32> to vector<1x70xf32>
    %66 = vector.broadcast %65 : vector<1x70xf32> to vector<8x70xf32>
    %67 = arith.addf %64, %66 : vector<8x70xf32>
    %cst_29 = arith.constant dense<0.000000e+00> : vector<8xf32>
    %68 = vector.multi_reduction <add>, %67, %cst_29 [1] : vector<8x70xf32> to vector<8xf32>
    %69 = vector.shape_cast %68 : vector<8xf32> to vector<8x1xf32>
    %cst_30 = arith.constant 7.000000e+01 : f32
    %70 = vector.broadcast %cst_30 : f32 to vector<8x1xf32>
    %71 = arith.divf %69, %70 : vector<8x1xf32>
    %72 = vector.broadcast %71 : vector<8x1xf32> to vector<8x70xf32>
    %73 = arith.subf %67, %72 : vector<8x70xf32>
    %74 = arith.mulf %73, %73 : vector<8x70xf32>
    %cst_31 = arith.constant dense<0.000000e+00> : vector<8xf32>
    %75 = vector.multi_reduction <add>, %74, %cst_31 [1] : vector<8x70xf32> to vector<8xf32>
    %76 = vector.shape_cast %75 : vector<8xf32> to vector<8x1xf32>
    %cst_32 = arith.constant 7.000000e+01 : f32
    %77 = vector.broadcast %cst_32 : f32 to vector<8x1xf32>
    %78 = arith.divf %76, %77 : vector<8x1xf32>
    %79 = vector.broadcast %71 : vector<8x1xf32> to vector<8x70xf32>
    %80 = arith.subf %67, %79 : vector<8x70xf32>
    %cst_33 = arith.constant 9.99999974E-6 : f32
    %81 = vector.broadcast %cst_33 : f32 to vector<8x1xf32>
    %82 = arith.addf %78, %81 : vector<8x1xf32>
    %83 = math.rsqrt %82 : vector<8x1xf32>
    %84 = vector.broadcast %83 : vector<8x1xf32> to vector<8x70xf32>
    %85 = arith.mulf %80, %84 : vector<8x70xf32>
    %86 = vector.extract_strided_slice %0 {offsets = [0, 0], sizes = [1, 70], strides = [1, 1]} : vector<8x256xf32> to vector<1x70xf32>
    %87 = vector.broadcast %86 : vector<1x70xf32> to vector<8x70xf32>
    %88 = arith.mulf %85, %87 : vector<8x70xf32>
    %89 = vector.extract_strided_slice %0 {offsets = [1, 0], sizes = [1, 70], strides = [1, 1]} : vector<8x256xf32> to vector<1x70xf32>
    %90 = vector.broadcast %89 : vector<1x70xf32> to vector<8x70xf32>
    %91 = arith.addf %88, %90 : vector<8x70xf32>
    %92 = arith.truncf %91 : vector<8x70xf32> to vector<8x70xbf16>
    %c0_34 = arith.constant 0 : index
    %c0_35 = arith.constant 0 : index
    %93 = vector.load %arg8[%c0_34, %c0_35] : memref<70x70xbf16, #tpu.memory_space<vmem>>, vector<70x70xbf16>
    %cst_36 = arith.constant dense<0.000000e+00> : vector<8x70xf32>
    %94 = tpu.matmul %92, %93, %cst_36 {dimension_numbers = #tpu.dot_dimension_numbers<[1], [0], [0], [1], [0, 0, 1, 1], [], []>} : vector<8x70xbf16>, vector<70x70xbf16>, vector<8x70xf32> -> vector<8x70xf32>
    %95 = vector.extract_strided_slice %0 {offsets = [5, 0], sizes = [1, 70], strides = [1, 1]} : vector<8x256xf32> to vector<1x70xf32>
    %96 = vector.broadcast %95 : vector<1x70xf32> to vector<8x70xf32>
    %97 = arith.addf %94, %96 : vector<8x70xf32>
    %cst_37 = arith.constant 0.000000e+00 : f32
    %98 = vector.broadcast %cst_37 : f32 to vector<8x70xf32>
    %99 = arith.maximumf %97, %98 : vector<8x70xf32>
    %100 = arith.truncf %99 : vector<8x70xf32> to vector<8x70xbf16>
    %c0_38 = arith.constant 0 : index
    %c0_39 = arith.constant 0 : index
    %101 = vector.load %arg9[%c0_38, %c0_39] : memref<70x70xbf16, #tpu.memory_space<vmem>>, vector<70x70xbf16>
    %cst_40 = arith.constant dense<0.000000e+00> : vector<8x70xf32>
    %102 = tpu.matmul %100, %101, %cst_40 {dimension_numbers = #tpu.dot_dimension_numbers<[1], [0], [0], [1], [0, 0, 1, 1], [], []>} : vector<8x70xbf16>, vector<70x70xbf16>, vector<8x70xf32> -> vector<8x70xf32>
    %103 = vector.extract_strided_slice %0 {offsets = [6, 0], sizes = [1, 70], strides = [1, 1]} : vector<8x256xf32> to vector<1x70xf32>
    %104 = vector.broadcast %103 : vector<1x70xf32> to vector<8x70xf32>
    %105 = arith.addf %102, %104 : vector<8x70xf32>
    %106 = arith.addf %105, %91 : vector<8x70xf32>
    %cst_41 = arith.constant 0.000000e+00 : f32
    %107 = vector.broadcast %cst_41 : f32 to vector<8x70xf32>
    %108 = arith.maximumf %106, %107 : vector<8x70xf32>
    %109 = arith.truncf %108 : vector<8x70xf32> to vector<8x70xbf16>
    %c0_42 = arith.constant 0 : index
    %c0_43 = arith.constant 0 : index
    %110 = vector.load %arg10[%c0_42, %c0_43] : memref<70x2xbf16, #tpu.memory_space<vmem>>, vector<70x2xbf16>
    %cst_44 = arith.constant dense<0.000000e+00> : vector<8x2xf32>
    %111 = tpu.matmul %109, %110, %cst_44 {dimension_numbers = #tpu.dot_dimension_numbers<[1], [0], [0], [1], [0, 0, 1, 1], [], []>} : vector<8x70xbf16>, vector<70x2xbf16>, vector<8x2xf32> -> vector<8x2xf32>
    %112 = vector.extract_strided_slice %0 {offsets = [7, 0], sizes = [1, 2], strides = [1, 1]} : vector<8x256xf32> to vector<1x2xf32>
    %113 = vector.broadcast %112 : vector<1x2xf32> to vector<8x2xf32>
    %114 = arith.addf %111, %113 : vector<8x2xf32>
    %c0_45 = arith.constant 0 : index
    %c0_46 = arith.constant 0 : index
    %115 = vector.load %arg11[%c0_45, %c0_46] : memref<8x2xf32, #tpu.memory_space<vmem>>, vector<8x2xf32>
    tpu.vector_store %arg11[%c0_45, %c0_46], %114 {strides = array<i32>} : memref<8x2xf32, #tpu.memory_space<vmem>>, vector<8x2xf32>,
    return
  }
  func.func @transform_0(%arg0: i32) -> (i32, i32) {
    %c0_i32 = arith.constant 0 : i32
    %c0_i32_0 = arith.constant 0 : i32
    return %arg0, %c0_i32 : i32, i32
  }
  func.func @transform_1(%arg0: i32) -> (i32, i32) {
    %c0_i32 = arith.constant 0 : i32
    %c0_i32_0 = arith.constant 0 : i32
    return %arg0, %c0_i32 : i32, i32
  }
  func.func @transform_2(%arg0: i32) -> (i32, i32) {
    %c0_i32 = arith.constant 0 : i32
    %c0_i32_0 = arith.constant 0 : i32
    %c0_i32_1 = arith.constant 0 : i32
    return %c0_i32, %c0_i32_0 : i32, i32
  }
  func.func @transform_3(%arg0: i32) -> (i32, i32) {
    %c0_i32 = arith.constant 0 : i32
    %c0_i32_0 = arith.constant 0 : i32
    %c0_i32_1 = arith.constant 0 : i32
    return %c0_i32, %c0_i32_0 : i32, i32
  }
  func.func @transform_4(%arg0: i32) -> (i32, i32) {
    %c0_i32 = arith.constant 0 : i32
    %c0_i32_0 = arith.constant 0 : i32
    %c0_i32_1 = arith.constant 0 : i32
    return %c0_i32, %c0_i32_0 : i32, i32
  }
  func.func @transform_5(%arg0: i32) -> (i32, i32) {
    %c0_i32 = arith.constant 0 : i32
    %c0_i32_0 = arith.constant 0 : i32
    %c0_i32_1 = arith.constant 0 : i32
    return %c0_i32, %c0_i32_0 : i32, i32
  }
  func.func @transform_6(%arg0: i32) -> (i32, i32) {
    %c0_i32 = arith.constant 0 : i32
    %c0_i32_0 = arith.constant 0 : i32
    %c0_i32_1 = arith.constant 0 : i32
    return %c0_i32, %c0_i32_0 : i32, i32
  }
  func.func @transform_7(%arg0: i32) -> (i32, i32) {
    %c0_i32 = arith.constant 0 : i32
    %c0_i32_0 = arith.constant 0 : i32
    %c0_i32_1 = arith.constant 0 : i32
    return %c0_i32, %c0_i32_0 : i32, i32
  }
  func.func @transform_8(%arg0: i32) -> (i32, i32) {
    %c0_i32 = arith.constant 0 : i32
    %c0_i32_0 = arith.constant 0 : i32
    %c0_i32_1 = arith.constant 0 : i32
    return %c0_i32, %c0_i32_0 : i32, i32
  }
  func.func @transform_9(%arg0: i32) -> (i32, i32) {
    %c0_i32 = arith.constant 0 : i32
    %c0_i32_0 = arith.constant 0 : i32
    %c0_i32_1 = arith.constant 0 : i32
    return %c0_i32, %c0_i32_0 : i32, i32
  }
  func.func @transform_10(%arg0: i32) -> (i32, i32) {
    %c0_i32 = arith.constant 0 : i32
    %c0_i32_0 = arith.constant 0 : i32
    return %arg0, %c0_i32 : i32, i32
  }
}

</mosaic_0001>

<llo_original>
// kernel: tpu_custom_call.1
$region0: #{tpu_custom_call.1}
  #allocation0 [shape = 'u32[]', space=smem, size = 0x4, offset = 0x4, fixed_abs, tag = 'smem constant byte address 0x4 - core index']
  #allocation1 [shape = 'u32[144,128]{1,0:T(1,128)}', space=vmem, size = 0x12000, scoped, tag = 'internal scratch']
  %s0 = inlined_call_operand.vmem [shape: f32[8,100], index: 0, kind: input, shape index: {}]
  %s1 = inlined_call_operand.vmem [shape: f32[8,4], index: 1, kind: input, shape index: {}]
  %s2 = inlined_call_operand.vmem [shape: f32[8,256], index: 2, kind: input, shape index: {}]
  %s3 = inlined_call_operand.vmem [shape: bf16[100,200], index: 3, kind: input, shape index: {}]
  %s4 = inlined_call_operand.vmem [shape: bf16[200,70], index: 4, kind: input, shape index: {}]
  %s5 = inlined_call_operand.vmem [shape: bf16[4,10], index: 5, kind: input, shape index: {}]
  %s6 = inlined_call_operand.vmem [shape: bf16[10,70], index: 6, kind: input, shape index: {}]
  %s7 = inlined_call_operand.vmem [shape: bf16[70,70], index: 7, kind: input, shape index: {}]
  %s8 = inlined_call_operand.vmem [shape: bf16[70,70], index: 8, kind: input, shape index: {}]
  %s9 = inlined_call_operand.vmem [shape: bf16[70,2], index: 9, kind: input, shape index: {}]
  %s10 = inlined_call_operand.vmem [shape: f32[8,2], index: 10, kind: output, shape index: {}]
  %s11 = sld [smem:[#allocation0]]
  $region50: #{tpu_custom_call.1} parent=0
    _
  %s13 = ssub.s32 1, %s11
  %s14 = scalar_select 0, %s13, %s11
  // Predicated region
  $region2: #{tpu_custom_call.1} parent=0 // pred_check
    _
  $region3: #{tpu_custom_call.1} parent=0 // pred_check_branch
    %16 = sbr.rel (0) target = $region5
  $region4: #{tpu_custom_call.1} parent=0 // pred_region
    _
  $region5: #{tpu_custom_call.1} parent=0 // pred_fallthru
    _
  // Predicated region
  $region6: #{tpu_custom_call.1} parent=0 // pred_check
    _
  $region7: #{tpu_custom_call.1} parent=0 // pred_check_branch
    %18 = sbr.rel (0) target = $region9
  $region8: #{tpu_custom_call.1} parent=0 // pred_region
    _
  $region9: #{tpu_custom_call.1} parent=0 // pred_fallthru
    _
  // Predicated region
  $region10: #{tpu_custom_call.1} parent=0 // pred_check
    _
  $region11: #{tpu_custom_call.1} parent=0 // pred_check_branch
    %20 = sbr.rel (0) target = $region13
  $region12: #{tpu_custom_call.1} parent=0 // pred_region
    _
  $region13: #{tpu_custom_call.1} parent=0 // pred_fallthru
    _
  // Predicated region
  $region14: #{tpu_custom_call.1} parent=0 // pred_check
    _
  $region15: #{tpu_custom_call.1} parent=0 // pred_check_branch
    %22 = sbr.rel (0) target = $region17
  $region16: #{tpu_custom_call.1} parent=0 // pred_region
    _
  $region17: #{tpu_custom_call.1} parent=0 // pred_fallthru
    _
  // Predicated region
  $region18: #{tpu_custom_call.1} parent=0 // pred_check
    _
  $region19: #{tpu_custom_call.1} parent=0 // pred_check_branch
    %24 = sbr.rel (0) target = $region21
  $region20: #{tpu_custom_call.1} parent=0 // pred_region
    _
  $region21: #{tpu_custom_call.1} parent=0 // pred_fallthru
    _
  // Predicated region
  $region22: #{tpu_custom_call.1} parent=0 // pred_check
    _
  $region23: #{tpu_custom_call.1} parent=0 // pred_check_branch
    %26 = sbr.rel (0) target = $region25
  $region24: #{tpu_custom_call.1} parent=0 // pred_region
    _
  $region25: #{tpu_custom_call.1} parent=0 // pred_fallthru
    _
  // Predicated region
  $region26: #{tpu_custom_call.1} parent=0 // pred_check
    _
  $region27: #{tpu_custom_call.1} parent=0 // pred_check_branch
    %28 = sbr.rel (0) target = $region29
  $region28: #{tpu_custom_call.1} parent=0 // pred_region
    _
  $region29: #{tpu_custom_call.1} parent=0 // pred_fallthru
    _
  // Predicated region
  $region30: #{tpu_custom_call.1} parent=0 // pred_check
    _
  $region31: #{tpu_custom_call.1} parent=0 // pred_check_branch
    %30 = sbr.rel (0) target = $region33
  $region32: #{tpu_custom_call.1} parent=0 // pred_region
    _
  $region33: #{tpu_custom_call.1} parent=0 // pred_fallthru
    _
  // Predicated region
  $region34: #{tpu_custom_call.1} parent=0 // pred_check
    _
  $region35: #{tpu_custom_call.1} parent=0 // pred_check_branch
    %32 = sbr.rel (0) target = $region37
  $region36: #{tpu_custom_call.1} parent=0 // pred_region
    _
  $region37: #{tpu_custom_call.1} parent=0 // pred_fallthru
    _
  // Predicated region
  $region38: #{tpu_custom_call.1} parent=0 // pred_check
    _
  $region39: #{tpu_custom_call.1} parent=0 // pred_check_branch
    %34 = sbr.rel (0) target = $region41
  $region40: #{tpu_custom_call.1} parent=0 // pred_region
    _
  $region41: #{tpu_custom_call.1} parent=0 // pred_fallthru
    _
  %v36 = vld [vmem:[%s2] sm:$0xff]
  %v37 = vld [vmem:[%s2 + $0x8] sm:$0xff]
  %v38 = vld [vmem:[%s0] sm:$0xff]
  %v39 = vld [vmem:[%s1] sm:$0xff]
  %vm40 = vcmask 818176
  %v41 = vsel %vm40, %v38, 0.0
  %42 = vadd.xlane.f32.xlu0 %v41
  %v43 = vpop.xlane.xlu0 %42
  %v44 = vrcp.pop 100.0
  %v45 = vmul.f32 %v43, %v44
  %v46 = vsub.f32 %v38, %v45
  %v47 = vmul.f32 %v46, %v46
  %v48 = vsel %vm40, %v47, 0.0
  %49 = vadd.xlane.f32.xlu0 %v48
  %v50 = vpop.xlane.xlu0 %49
  %v51 = vmul.f32 %v50, %v44
  %v52 = vadd.f32 %v51, 1e-05
  %v53 = vrsqrt.pop %v52
  %v54 = vmul.f32 %v46, %v53
  %v55 = vpack.c.bf16 %v54, %v54
  %v56 = vld [vmem:[%s3] sm:$0xff]
  %v57 = vld [vmem:[%s3 + $0x8] sm:$0xff]
  %v58 = vld [vmem:[%s3 + $0x10] sm:$0xff]
  %v59 = vld [vmem:[%s3 + $0x18] sm:$0xff]
  %v60 = vld [vmem:[%s3 + $0x20] sm:$0xff]
  %v61 = vld [vmem:[%s3 + $0x28] sm:$0xff]
  %v62 = vld [vmem:[%s3 + $0x30] sm:$0xff]
  %v63 = vld [vmem:[%s3 + $0x38] sm:$0xff]
  %v64 = vld [vmem:[%s3 + $0x40] sm:$0xff]
  %v65 = vld [vmem:[%s3 + $0x48] sm:$0xff]
  %v66 = vld [vmem:[%s3 + $0x50] sm:$0xff]
  %v67 = vld [vmem:[%s3 + $0x58] sm:$0xff]
  %v68 = vld [vmem:[%s3 + $0x60] sm:$0x33]
  %v69 = vlaneseq
  %v70 = vshrl.u32 %v69, 7
  %v71 = vsub.s32 2, %v70
  %v72 = vrot.slane %v36, %v71
  %v73 = vlaneseq
  %v74 = vshrl.u32 %v73, 7
  %v75 = vsub.s32 2, %v74
  %v76 = vrot.slane %v37, %v75
  %v90 = vunpack.c.l.b16 %v56
  %v91 = vunpack.c.h.b16 %v56
  %v92 = vunpack.c.l.b16 %v57
  %v93 = vunpack.c.h.b16 %v57
  %v94 = vunpack.c.l.b16 %v58
  %v95 = vunpack.c.h.b16 %v58
  %v96 = vunpack.c.l.b16 %v59
  %v97 = vunpack.c.h.b16 %v59
  %v98 = vunpack.c.l.b16 %v60
  %v99 = vunpack.c.h.b16 %v60
  %v100 = vunpack.c.l.b16 %v61
  %v101 = vunpack.c.h.b16 %v61
  %v102 = vunpack.c.l.b16 %v62
  %v103 = vunpack.c.h.b16 %v62
  %v104 = vunpack.c.l.b16 %v63
  %v105 = vunpack.c.h.b16 %v63
  %v106 = vunpack.c.l.b16 %v64
  %v107 = vunpack.c.h.b16 %v64
  %v108 = vunpack.c.l.b16 %v65
  %v109 = vunpack.c.h.b16 %v65
  %v110 = vunpack.c.l.b16 %v66
  %v111 = vunpack.c.h.b16 %v66
  %v112 = vunpack.c.l.b16 %v67
  %v113 = vunpack.c.h.b16 %v67
  %v114 = vunpack.c.l.b16 %v68
  %v115 = vunpack.c.h.b16 %v68
  %v116 = vpack.c.b16 %v92, %v90
  %v117 = vpack.c.b16 %v93, %v91
  %v118 = vpack.c.b16 %v96, %v94
  %v119 = vpack.c.b16 %v97, %v95
  %v120 = vpack.c.b16 %v100, %v98
  %v121 = vpack.c.b16 %v101, %v99
  %v122 = vpack.c.b16 %v104, %v102
  %v123 = vpack.c.b16 %v105, %v103
  %v124 = vpack.c.b16 %v108, %v106
  %v125 = vpack.c.b16 %v109, %v107
  %v126 = vpack.c.b16 %v112, %v110
  %v127 = vpack.c.b16 %v113, %v111
  %v128 = vpack.c.b16 %v114, %v114
  %v129 = vpack.c.b16 %v115, %v115
  %v143 = vsel %vm40, %v55, 0
  %vm145 = vcmask 1041408
  %v147 = vsel %vm145, %v128, 0
  %v150 = vsel %vm145, %v129, 0
  %152 = vmatprep.subr.bf16.mxu0 %v117
  %153 = vmatpush1.bf16.msra.mxu0 %v116
  %154 = vmatprep.subr.bf16.mxu0 %v119
  %155 = vmatpush1.bf16.msra.mxu0 %v118
  %156 = vmatprep.subr.bf16.mxu0 %v121
  %157 = vmatpush1.bf16.msra.mxu0 %v120
  %158 = vmatprep.subr.bf16.mxu0 %v123
  %159 = vmatpush1.bf16.msra.mxu0 %v122
  %160 = vmatprep.subr.bf16.mxu0 %v125
  %161 = vmatpush1.bf16.msra.mxu0 %v124
  %162 = vmatprep.subr.bf16.mxu0 %v127
  %163 = vmatpush1.bf16.msra.mxu0 %v126
  %164 = vmatprep.subr.bf16.mxu0 %v150
  %165 = vmatpush1.bf16.msra.mxu0 %v147
  %166 = vmatprep.subr.bf16.mxu0 0
  %167 = vmatpush1.bf16.msra.mxu0 0
  %168 = vmatprep.subr.bf16.mxu0 0
  %169 = vmatpush1.bf16.msra.mxu0 0
  %170 = vmatprep.subr.bf16.mxu0 0
  %171 = vmatpush1.bf16.msra.mxu0 0
  %172 = vmatprep.subr.bf16.mxu0 0
  %173 = vmatpush1.bf16.msra.mxu0 0
  %174 = vmatprep.subr.bf16.mxu0 0
  %175 = vmatpush1.bf16.msra.mxu0 0
  %176 = vmatprep.subr.bf16.mxu0 0
  %177 = vmatpush1.bf16.msra.mxu0 0
  %178 = vmatprep.subr.bf16.mxu0 0
  %179 = vmatpush1.bf16.msra.mxu0 0
  %180 = vmatprep.subr.bf16.mxu0 0
  %181 = vmatpush1.bf16.msra.mxu0 0
  %182 = vmatprep.subr.bf16.mxu0 0
  %183 = vmatpush1.bf16.msra.mxu0 0
  %184 = vmatprep.mubr.bf16.mxu0 0
  %185 = vmatmul.mubr.bf16.gmra.mrb[0].mxu0 %v143
  %v186 = vpop.f32.mrb[0].mxu0
  %v187 = vadd.f32 %v72, %v186
  %v188 = vpop.f32.mrb[0].mxu0
  %v189 = vadd.f32 %v76, %v188
  %v190 = vpop.f32.mrb[0].mxu0
  %v191 = vpop.f32.mrb[0].mxu0
  %192 = vdwg.mxu0
  %v193 = vmax.f32 %v187, 0.0
  %v194 = vmax.f32 %v189, 0.0
  %vm195 = vcmask 31744
  %v196 = vsel %vm195, %v39, 0.0
  %197 = vadd.xlane.f32.xlu0 %v196
  %v198 = vpop.xlane.xlu0 %197
  %v199 = vrcp.pop 4.0
  %v200 = vmul.f32 %v198, %v199
  %v201 = vsub.f32 %v39, %v200
  %v202 = vmul.f32 %v201, %v201
  %v203 = vsel %vm195, %v202, 0.0
  %204 = vadd.xlane.f32.xlu0 %v203
  %v205 = vpop.xlane.xlu0 %204
  %v206 = vmul.f32 %v205, %v199
  %v207 = vadd.f32 %v206, 1e-05
  %v208 = vrsqrt.pop %v207
  %v209 = vmul.f32 %v201, %v208
  %v210 = vpack.c.bf16 %v209, %v209
  %v211 = vld [vmem:[%s5] sm:$0x3]
  %v212 = vlaneseq
  %v213 = vshrl.u32 %v212, 7
  %v214 = vsub.s32 3, %v213
  %v215 = vrot.slane %v36, %v214
  %v217 = vsel %vm195, %v210, 0
  %v220 = vsel %vm145, %v211, 0
  %222 = vmatprep.subr.bf16.mxu0 0
  %223 = vmatpush1.bf16.msra.mxu0 %v220
  %224 = vmatprep.subr.bf16.mxu0 0
  %225 = vmatpush1.bf16.msra.mxu0 0
  %226 = vmatprep.subr.bf16.mxu0 0
  %227 = vmatpush1.bf16.msra.mxu0 0
  %228 = vmatprep.subr.bf16.mxu0 0
  %229 = vmatpush1.bf16.msra.mxu0 0
  %230 = vmatprep.subr.bf16.mxu0 0
  %231 = vmatpush1.bf16.msra.mxu0 0
  %232 = vmatprep.subr.bf16.mxu0 0
  %233 = vmatpush1.bf16.msra.mxu0 0
  %234 = vmatprep.subr.bf16.mxu0 0
  %235 = vmatpush1.bf16.msra.mxu0 0
  %236 = vmatprep.subr.bf16.mxu0 0
  %237 = vmatpush1.bf16.msra.mxu0 0
  %238 = vmatprep.subr.bf16.mxu0 0
  %239 = vmatpush1.bf16.msra.mxu0 0
  %240 = vmatprep.subr.bf16.mxu0 0
  %241 = vmatpush1.bf16.msra.mxu0 0
  %242 = vmatprep.subr.bf16.mxu0 0
  %243 = vmatpush1.bf16.msra.mxu0 0
  %244 = vmatprep.subr.bf16.mxu0 0
  %245 = vmatpush1.bf16.msra.mxu0 0
  %246 = vmatprep.subr.bf16.mxu0 0
  %247 = vmatpush1.bf16.msra.mxu0 0
  %248 = vmatprep.subr.bf16.mxu0 0
  %249 = vmatpush1.bf16.msra.mxu0 0
  %250 = vmatprep.subr.bf16.mxu0 0
  %251 = vmatpush1.bf16.msra.mxu0 0
  %252 = vmatprep.subr.bf16.mxu0 0
  %253 = vmatpush1.bf16.msra.mxu0 0
  %254 = vmatprep.mubr.bf16.mxu0 0
  %255 = vmatmul.mubr.bf16.gmra.mrb[0].mxu0 %v217
  %v256 = vpop.f32.mrb[0].mxu0
  %v257 = vadd.f32 %v215, %v256
  %v258 = vpop.f32.mrb[0].mxu0
  %v259 = vpop.f32.mrb[0].mxu0
  %v260 = vpop.f32.mrb[0].mxu0
  %261 = vdwg.mxu0
  %vm262 = vcmp.ge.f32.partialorder %v257, 0.0
  %v263 = vmul.f32 %v257, 0.01
  %v264 = vsel %vm262, %v257, %v263
  %v265 = vpack.c.bf16 %v193, %v193
  %v266 = vpack.c.bf16 %v194, %v194
  %v267 = vld [vmem:[%s4] sm:$0xf]
  %v268 = vld [vmem:[%s4 + $0x4] sm:$0xf]
  %v269 = vld [vmem:[%s4 + $0x8] sm:$0xf]
  %v270 = vld [vmem:[%s4 + $0xc] sm:$0xf]
  %v271 = vld [vmem:[%s4 + $0x10] sm:$0xf]
  %v272 = vld [vmem:[%s4 + $0x14] sm:$0xf]
  %v273 = vld [vmem:[%s4 + $0x18] sm:$0xf]
  %v274 = vld [vmem:[%s4 + $0x1c] sm:$0xf]
  %v275 = vld [vmem:[%s4 + $0x20] sm:$0xf]
  %v276 = vld [vmem:[%s4 + $0x24] sm:$0xf]
  %v277 = vld [vmem:[%s4 + $0x28] sm:$0xf]
  %v278 = vld [vmem:[%s4 + $0x2c] sm:$0xf]
  %v279 = vld [vmem:[%s4 + $0x30] sm:$0xf]
  %v280 = vld [vmem:[%s4 + $0x34] sm:$0xf]
  %v281 = vld [vmem:[%s4 + $0x38] sm:$0xf]
  %v282 = vld [vmem:[%s4 + $0x3c] sm:$0xf]
  %v283 = vld [vmem:[%s4 + $0x40] sm:$0xf]
  %v284 = vld [vmem:[%s4 + $0x44] sm:$0xf]
  %v285 = vld [vmem:[%s4 + $0x48] sm:$0xf]
  %v286 = vld [vmem:[%s4 + $0x4c] sm:$0xf]
  %v287 = vld [vmem:[%s4 + $0x50] sm:$0xf]
  %v288 = vld [vmem:[%s4 + $0x54] sm:$0xf]
  %v289 = vld [vmem:[%s4 + $0x58] sm:$0xf]
  %v290 = vld [vmem:[%s4 + $0x5c] sm:$0xf]
  %v291 = vld [vmem:[%s4 + $0x60] sm:$0xf]
  %v292 = vpack.c.bf16 %v264, %v264
  %v293 = vld [vmem:[%s6] sm:$0xf]
  %v294 = vld [vmem:[%s6 + $0x4] sm:$0x1]
  %v297 = vunpack.c.l.b16 %v293
  %v298 = vunpack.c.l.b16 %v294
  %v299 = vpack.c.b16 %v298, %v297
  %vm300 = vcmask 80896
  %v302 = vsel %vm300, %v292, 0
  %vm304 = vcmask 1044480
  %v306 = vsel %vm304, %v299, 0
  %308 = vmatprep.subr.bf16.mxu0 0
  %309 = vmatpush1.bf16.msra.mxu0 %v306
  %310 = vmatprep.subr.bf16.mxu0 0
  %311 = vmatpush1.bf16.msra.mxu0 0
  %312 = vmatprep.subr.bf16.mxu0 0
  %313 = vmatpush1.bf16.msra.mxu0 0
  %314 = vmatprep.subr.bf16.mxu0 0
  %315 = vmatpush1.bf16.msra.mxu0 0
  %316 = vmatprep.subr.bf16.mxu0 0
  %317 = vmatpush1.bf16.msra.mxu0 0
  %318 = vmatprep.subr.bf16.mxu0 0
  %319 = vmatpush1.bf16.msra.mxu0 0
  %320 = vmatprep.subr.bf16.mxu0 0
  %321 = vmatpush1.bf16.msra.mxu0 0
  %322 = vmatprep.subr.bf16.mxu0 0
  %323 = vmatpush1.bf16.msra.mxu0 0
  %324 = vmatprep.subr.bf16.mxu0 0
  %325 = vmatpush1.bf16.msra.mxu0 0
  %326 = vmatprep.subr.bf16.mxu0 0
  %327 = vmatpush1.bf16.msra.mxu0 0
  %328 = vmatprep.subr.bf16.mxu0 0
  %329 = vmatpush1.bf16.msra.mxu0 0
  %330 = vmatprep.subr.bf16.mxu0 0
  %331 = vmatpush1.bf16.msra.mxu0 0
  %332 = vmatprep.subr.bf16.mxu0 0
  %333 = vmatpush1.bf16.msra.mxu0 0
  %334 = vmatprep.subr.bf16.mxu0 0
  %335 = vmatpush1.bf16.msra.mxu0 0
  %336 = vmatprep.subr.bf16.mxu0 0
  %337 = vmatpush1.bf16.msra.mxu0 0
  %338 = vmatprep.subr.bf16.mxu0 0
  %339 = vmatpush1.bf16.msra.mxu0 0
  %340 = vmatprep.mubr.bf16.mxu0 0
  %341 = vmatmul.mubr.bf16.gmra.mrb[0].mxu0 %v302
  %v342 = vpop.f32.mrb[0].mxu0
  %v343 = vadd.f32 0.0, %v342
  %v344 = vpop.f32.mrb[0].mxu0
  %v345 = vpop.f32.mrb[0].mxu0
  %v346 = vpop.f32.mrb[0].mxu0
  %347 = vdwg.mxu0
  %v373 = vunpack.c.l.b16 %v267
  %v374 = vunpack.c.l.b16 %v268
  %v375 = vunpack.c.l.b16 %v269
  %v376 = vunpack.c.l.b16 %v270
  %v377 = vunpack.c.l.b16 %v271
  %v378 = vunpack.c.l.b16 %v272
  %v379 = vunpack.c.l.b16 %v273
  %v380 = vunpack.c.l.b16 %v274
  %v381 = vunpack.c.l.b16 %v275
  %v382 = vunpack.c.l.b16 %v276
  %v383 = vunpack.c.l.b16 %v277
  %v384 = vunpack.c.l.b16 %v278
  %v385 = vunpack.c.l.b16 %v279
  %v386 = vunpack.c.l.b16 %v280
  %v387 = vunpack.c.l.b16 %v281
  %v388 = vunpack.c.l.b16 %v282
  %v389 = vunpack.c.l.b16 %v283
  %v390 = vunpack.c.l.b16 %v284
  %v391 = vunpack.c.l.b16 %v285
  %v392 = vunpack.c.l.b16 %v286
  %v393 = vunpack.c.l.b16 %v287
  %v394 = vunpack.c.l.b16 %v288
  %v395 = vunpack.c.l.b16 %v289
  %v396 = vunpack.c.l.b16 %v290
  %v397 = vunpack.c.l.b16 %v291
  %v398 = vpack.c.b16 %v374, %v373
  %v399 = vpack.c.b16 %v376, %v375
  %v400 = vpack.c.b16 %v378, %v377
  %v401 = vpack.c.b16 %v380, %v379
  %v402 = vpack.c.b16 %v382, %v381
  %v403 = vpack.c.b16 %v384, %v383
  %v404 = vpack.c.b16 %v386, %v385
  %v405 = vpack.c.b16 %v388, %v387
  %v406 = vpack.c.b16 %v390, %v389
  %v407 = vpack.c.b16 %v392, %v391
  %v408 = vpack.c.b16 %v394, %v393
  %v409 = vpack.c.b16 %v396, %v395
  %v410 = vpack.c.b16 %v397, %v397
  %vm423 = vcmask 588800
  %v425 = vsel %vm423, %v266, 0
  %vm427 = vcmask 1043456
  %v429 = vsel %vm427, %v410, 0
  %431 = vmatprep.subr.bf16.mxu0 0
  %432 = vmatpush1.bf16.msra.mxu0 %v398
  %433 = vmatprep.subr.bf16.mxu0 0
  %434 = vmatpush1.bf16.msra.mxu0 %v399
  %435 = vmatprep.subr.bf16.mxu0 0
  %436 = vmatpush1.bf16.msra.mxu0 %v400
  %437 = vmatprep.subr.bf16.mxu0 0
  %438 = vmatpush1.bf16.msra.mxu0 %v401
  %439 = vmatprep.subr.bf16.mxu0 0
  %440 = vmatpush1.bf16.msra.mxu0 %v402
  %441 = vmatprep.subr.bf16.mxu0 0
  %442 = vmatpush1.bf16.msra.mxu0 %v403
  %443 = vmatprep.subr.bf16.mxu0 0
  %444 = vmatpush1.bf16.msra.mxu0 %v404
  %445 = vmatprep.subr.bf16.mxu0 0
  %446 = vmatpush1.bf16.msra.mxu0 %v405
  %447 = vmatprep.subr.bf16.mxu0 0
  %448 = vmatpush1.bf16.msra.mxu0 %v406
  %449 = vmatprep.subr.bf16.mxu0 0
  %450 = vmatpush1.bf16.msra.mxu0 %v407
  %451 = vmatprep.subr.bf16.mxu0 0
  %452 = vmatpush1.bf16.msra.mxu0 %v408
  %453 = vmatprep.subr.bf16.mxu0 0
  %454 = vmatpush1.bf16.msra.mxu0 %v409
  %455 = vmatprep.subr.bf16.mxu0 0
  %456 = vmatpush1.bf16.msra.mxu0 %v429
  %457 = vmatprep.subr.bf16.mxu0 0
  %458 = vmatpush1.bf16.msra.mxu0 0
  %459 = vmatprep.subr.bf16.mxu0 0
  %460 = vmatpush1.bf16.msra.mxu0 0
  %461 = vmatprep.subr.bf16.mxu0 0
  %462 = vmatpush1.bf16.msra.mxu0 0
  %463 = vmatprep.mubr.bf16.mxu0 %v425
  %464 = vmatmul.mubr.bf16.gmra.mrb[0].mxu0 %v265
  %v465 = vpop.f32.mrb[0].mxu0
  %v466 = vadd.f32 %v343, %v465
  %v467 = vpop.f32.mrb[0].mxu0
  %v468 = vpop.f32.mrb[0].mxu0
  %v469 = vpop.f32.mrb[0].mxu0
  %470 = vdwg.mxu0
  %v471 = vlaneseq
  %v472 = vshrl.u32 %v471, 7
  %v473 = vsub.s32 4, %v472
  %v474 = vrot.slane %v36, %v473
  %v475 = vadd.f32 %v466, %v474
  %vm476 = vcmask 572416
  %v477 = vsel %vm476, %v475, 0.0
  %478 = vadd.xlane.f32.xlu0 %v477
  %v479 = vpop.xlane.xlu0 %478
  %v480 = vrcp.pop 70.0
  %v481 = vmul.f32 %v479, %v480
  %v482 = vsub.f32 %v475, %v481
  %v483 = vmul.f32 %v482, %v482
  %v484 = vsel %vm476, %v483, 0.0
  %485 = vadd.xlane.f32.xlu0 %v484
  %v486 = vpop.xlane.xlu0 %485
  %v487 = vmul.f32 %v486, %v480
  %v488 = vadd.f32 %v487, 1e-05
  %v489 = vrsqrt.pop %v488
  %v490 = vmul.f32 %v482, %v489
  %v491 = vlaneseq
  %v492 = vshrl.u32 %v491, 7
  %v493 = vsub.s32 0, %v492
  %v494 = vrot.slane %v36, %v493
  %v495 = vmul.f32 %v490, %v494
  %v496 = vlaneseq
  %v497 = vshrl.u32 %v496, 7
  %v498 = vsub.s32 1, %v497
  %v499 = vrot.slane %v36, %v498
  %v500 = vadd.f32 %v495, %v499
  %v501 = vpack.c.bf16 %v500, %v500
  %v502 = vld [vmem:[%s7] sm:$0xf]
  %v503 = vld [vmem:[%s7 + $0x4] sm:$0xf]
  %v504 = vld [vmem:[%s7 + $0x8] sm:$0xf]
  %v505 = vld [vmem:[%s7 + $0xc] sm:$0xf]
  %v506 = vld [vmem:[%s7 + $0x10] sm:$0xf]
  %v507 = vld [vmem:[%s7 + $0x14] sm:$0xf]
  %v508 = vld [vmem:[%s7 + $0x18] sm:$0xf]
  %v509 = vld [vmem:[%s7 + $0x1c] sm:$0xf]
  %v510 = vld [vmem:[%s7 + $0x20] sm:$0x7]
  %v511 = vlaneseq
  %v512 = vshrl.u32 %v511, 7
  %v513 = vsub.s32 5, %v512
  %v514 = vrot.slane %v36, %v513
  %v524 = vunpack.c.l.b16 %v502
  %v525 = vunpack.c.l.b16 %v503
  %v526 = vunpack.c.l.b16 %v504
  %v527 = vunpack.c.l.b16 %v505
  %v528 = vunpack.c.l.b16 %v506
  %v529 = vunpack.c.l.b16 %v507
  %v530 = vunpack.c.l.b16 %v508
  %v531 = vunpack.c.l.b16 %v509
  %v532 = vunpack.c.l.b16 %v510
  %v533 = vpack.c.b16 %v525, %v524
  %v534 = vpack.c.b16 %v527, %v526
  %v535 = vpack.c.b16 %v529, %v528
  %v536 = vpack.c.b16 %v531, %v530
  %v537 = vpack.c.b16 %v532, %v532
  %v543 = vsel %vm476, %v501, 0
  %vm545 = vcmask 1042432
  %v547 = vsel %vm545, %v537, 0
  %549 = vmatprep.subr.bf16.mxu0 0
  %550 = vmatpush1.bf16.msra.mxu0 %v533
  %551 = vmatprep.subr.bf16.mxu0 0
  %552 = vmatpush1.bf16.msra.mxu0 %v534
  %553 = vmatprep.subr.bf16.mxu0 0
  %554 = vmatpush1.bf16.msra.mxu0 %v535
  %555 = vmatprep.subr.bf16.mxu0 0
  %556 = vmatpush1.bf16.msra.mxu0 %v536
  %557 = vmatprep.subr.bf16.mxu0 0
  %558 = vmatpush1.bf16.msra.mxu0 %v547
  %559 = vmatprep.subr.bf16.mxu0 0
  %560 = vmatpush1.bf16.msra.mxu0 0
  %561 = vmatprep.subr.bf16.mxu0 0
  %562 = vmatpush1.bf16.msra.mxu0 0
  %563 = vmatprep.subr.bf16.mxu0 0
  %564 = vmatpush1.bf16.msra.mxu0 0
  %565 = vmatprep.subr.bf16.mxu0 0
  %566 = vmatpush1.bf16.msra.mxu0 0
  %567 = vmatprep.subr.bf16.mxu0 0
  %568 = vmatpush1.bf16.msra.mxu0 0
  %569 = vmatprep.subr.bf16.mxu0 0
  %570 = vmatpush1.bf16.msra.mxu0 0
  %571 = vmatprep.subr.bf16.mxu0 0
  %572 = vmatpush1.bf16.msra.mxu0 0
  %573 = vmatprep.subr.bf16.mxu0 0
  %574 = vmatpush1.bf16.msra.mxu0 0
  %575 = vmatprep.subr.bf16.mxu0 0
  %576 = vmatpush1.bf16.msra.mxu0 0
  %577 = vmatprep.subr.bf16.mxu0 0
  %578 = vmatpush1.bf16.msra.mxu0 0
  %579 = vmatprep.subr.bf16.mxu0 0
  %580 = vmatpush1.bf16.msra.mxu0 0
  %581 = vmatprep.mubr.bf16.mxu0 0
  %582 = vmatmul.mubr.bf16.gmra.mrb[0].mxu0 %v543
  %v583 = vpop.f32.mrb[0].mxu0
  %v584 = vadd.f32 %v514, %v583
  %v585 = vpop.f32.mrb[0].mxu0
  %v586 = vpop.f32.mrb[0].mxu0
  %v587 = vpop.f32.mrb[0].mxu0
  %588 = vdwg.mxu0
  %v589 = vmax.f32 %v584, 0.0
  %v590 = vpack.c.bf16 %v589, %v589
  %v591 = vld [vmem:[%s8] sm:$0xf]
  %v592 = vld [vmem:[%s8 + $0x4] sm:$0xf]
  %v593 = vld [vmem:[%s8 + $0x8] sm:$0xf]
  %v594 = vld [vmem:[%s8 + $0xc] sm:$0xf]
  %v595 = vld [vmem:[%s8 + $0x10] sm:$0xf]
  %v596 = vld [vmem:[%s8 + $0x14] sm:$0xf]
  %v597 = vld [vmem:[%s8 + $0x18] sm:$0xf]
  %v598 = vld [vmem:[%s8 + $0x1c] sm:$0xf]
  %v599 = vld [vmem:[%s8 + $0x20] sm:$0x7]
  %v600 = vlaneseq
  %v601 = vshrl.u32 %v600, 7
  %v602 = vsub.s32 6, %v601
  %v603 = vrot.slane %v36, %v602
  %v613 = vunpack.c.l.b16 %v591
  %v614 = vunpack.c.l.b16 %v592
  %v615 = vunpack.c.l.b16 %v593
  %v616 = vunpack.c.l.b16 %v594
  %v617 = vunpack.c.l.b16 %v595
  %v618 = vunpack.c.l.b16 %v596
  %v619 = vunpack.c.l.b16 %v597
  %v620 = vunpack.c.l.b16 %v598
  %v621 = vunpack.c.l.b16 %v599
  %v622 = vpack.c.b16 %v614, %v613
  %v623 = vpack.c.b16 %v616, %v615
  %v624 = vpack.c.b16 %v618, %v617
  %v625 = vpack.c.b16 %v620, %v619
  %v626 = vpack.c.b16 %v621, %v621
  %v632 = vsel %vm476, %v590, 0
  %v635 = vsel %vm545, %v626, 0
  %637 = vmatprep.subr.bf16.mxu0 0
  %638 = vmatpush1.bf16.msra.mxu0 %v622
  %639 = vmatprep.subr.bf16.mxu0 0
  %640 = vmatpush1.bf16.msra.mxu0 %v623
  %641 = vmatprep.subr.bf16.mxu0 0
  %642 = vmatpush1.bf16.msra.mxu0 %v624
  %643 = vmatprep.subr.bf16.mxu0 0
  %644 = vmatpush1.bf16.msra.mxu0 %v625
  %645 = vmatprep.subr.bf16.mxu0 0
  %646 = vmatpush1.bf16.msra.mxu0 %v635
  %647 = vmatprep.subr.bf16.mxu0 0
  %648 = vmatpush1.bf16.msra.mxu0 0
  %649 = vmatprep.subr.bf16.mxu0 0
  %650 = vmatpush1.bf16.msra.mxu0 0
  %651 = vmatprep.subr.bf16.mxu0 0
  %652 = vmatpush1.bf16.msra.mxu0 0
  %653 = vmatprep.subr.bf16.mxu0 0
  %654 = vmatpush1.bf16.msra.mxu0 0
  %655 = vmatprep.subr.bf16.mxu0 0
  %656 = vmatpush1.bf16.msra.mxu0 0
  %657 = vmatprep.subr.bf16.mxu0 0
  %658 = vmatpush1.bf16.msra.mxu0 0
  %659 = vmatprep.subr.bf16.mxu0 0
  %660 = vmatpush1.bf16.msra.mxu0 0
  %661 = vmatprep.subr.bf16.mxu0 0
  %662 = vmatpush1.bf16.msra.mxu0 0
  %663 = vmatprep.subr.bf16.mxu0 0
  %664 = vmatpush1.bf16.msra.mxu0 0
  %665 = vmatprep.subr.bf16.mxu0 0
  %666 = vmatpush1.bf16.msra.mxu0 0
  %667 = vmatprep.subr.bf16.mxu0 0
  %668 = vmatpush1.bf16.msra.mxu0 0
  %669 = vmatprep.mubr.bf16.mxu0 0
  %670 = vmatmul.mubr.bf16.gmra.mrb[0].mxu0 %v632
  %v671 = vpop.f32.mrb[0].mxu0
  %v672 = vadd.f32 %v603, %v671
  %v673 = vpop.f32.mrb[0].mxu0
  %v674 = vpop.f32.mrb[0].mxu0
  %v675 = vpop.f32.mrb[0].mxu0
  %676 = vdwg.mxu0
  %v677 = vadd.f32 %v672, %v500
  %v678 = vmax.f32 %v677, 0.0
  %v679 = vpack.c.bf16 %v678, %v678
  %v680 = vld [vmem:[%s9] sm:$0xf]
  %v681 = vld [vmem:[%s9 + $0x4] sm:$0xf]
  %v682 = vld [vmem:[%s9 + $0x8] sm:$0xf]
  %v683 = vld [vmem:[%s9 + $0xc] sm:$0xf]
  %v684 = vld [vmem:[%s9 + $0x10] sm:$0xf]
  %v685 = vld [vmem:[%s9 + $0x14] sm:$0xf]
  %v686 = vld [vmem:[%s9 + $0x18] sm:$0xf]
  %v687 = vld [vmem:[%s9 + $0x1c] sm:$0xf]
  %v688 = vld [vmem:[%s9 + $0x20] sm:$0x7]
  %v689 = vlaneseq
  %v690 = vshrl.u32 %v689, 7
  %v691 = vsub.s32 7, %v690
  %v692 = vrot.slane %v36, %v691
  %v702 = vunpack.c.l.b16 %v680
  %v703 = vunpack.c.l.b16 %v681
  %v704 = vunpack.c.l.b16 %v682
  %v705 = vunpack.c.l.b16 %v683
  %v706 = vunpack.c.l.b16 %v684
  %v707 = vunpack.c.l.b16 %v685
  %v708 = vunpack.c.l.b16 %v686
  %v709 = vunpack.c.l.b16 %v687
  %v710 = vunpack.c.l.b16 %v688
  %v711 = vpack.c.b16 %v703, %v702
  %v712 = vpack.c.b16 %v705, %v704
  %v713 = vpack.c.b16 %v707, %v706
  %v714 = vpack.c.b16 %v709, %v708
  %v715 = vpack.c.b16 %v710, %v710
  %v721 = vsel %vm476, %v679, 0
  %v724 = vsel %vm545, %v715, 0
  %726 = vmatprep.subr.bf16.mxu0 0
  %727 = vmatpush1.bf16.msra.mxu0 %v711
  %728 = vmatprep.subr.bf16.mxu0 0
  %729 = vmatpush1.bf16.msra.mxu0 %v712
  %730 = vmatprep.subr.bf16.mxu0 0
  %731 = vmatpush1.bf16.msra.mxu0 %v713
  %732 = vmatprep.subr.bf16.mxu0 0
  %733 = vmatpush1.bf16.msra.mxu0 %v714
  %734 = vmatprep.subr.bf16.mxu0 0
  %735 = vmatpush1.bf16.msra.mxu0 %v724
  %736 = vmatprep.subr.bf16.mxu0 0
  %737 = vmatpush1.bf16.msra.mxu0 0
  %738 = vmatprep.subr.bf16.mxu0 0
  %739 = vmatpush1.bf16.msra.mxu0 0
  %740 = vmatprep.subr.bf16.mxu0 0
  %741 = vmatpush1.bf16.msra.mxu0 0
  %742 = vmatprep.subr.bf16.mxu0 0
  %743 = vmatpush1.bf16.msra.mxu0 0
  %744 = vmatprep.subr.bf16.mxu0 0
  %745 = vmatpush1.bf16.msra.mxu0 0
  %746 = vmatprep.subr.bf16.mxu0 0
  %747 = vmatpush1.bf16.msra.mxu0 0
  %748 = vmatprep.subr.bf16.mxu0 0
  %749 = vmatpush1.bf16.msra.mxu0 0
  %750 = vmatprep.subr.bf16.mxu0 0
  %751 = vmatpush1.bf16.msra.mxu0 0
  %752 = vmatprep.subr.bf16.mxu0 0
  %753 = vmatpush1.bf16.msra.mxu0 0
  %754 = vmatprep.subr.bf16.mxu0 0
  %755 = vmatpush1.bf16.msra.mxu0 0
  %756 = vmatprep.subr.bf16.mxu0 0
  %757 = vmatpush1.bf16.msra.mxu0 0
  %758 = vmatprep.mubr.bf16.mxu0 0
  %759 = vmatmul.mubr.bf16.gmra.mrb[0].mxu0 %v721
  %v760 = vpop.f32.mrb[0].mxu0
  %v761 = vadd.f32 %v692, %v760
  %v762 = vpop.f32.mrb[0].mxu0
  %v763 = vpop.f32.mrb[0].mxu0
  %v764 = vpop.f32.mrb[0].mxu0
  %765 = vdwg.mxu0
  %vm766 = vcmask 15360
  %767 = vst.msk [vmem:[%s10] sm:$0xff] %vm766, %v761
  // Predicated region
  $region42: #{tpu_custom_call.1} parent=0 // pred_check
    _
  $region43: #{tpu_custom_call.1} parent=0 // pred_check_branch
    %769 = sbr.rel (0) target = $region45
  $region44: #{tpu_custom_call.1} parent=0 // pred_region
    _
  $region45: #{tpu_custom_call.1} parent=0 // pred_fallthru
    _
  // Predicated region
  $region46: #{tpu_custom_call.1} parent=0 // pred_check
    _
  $region47: #{tpu_custom_call.1} parent=0 // pred_check_branch
    %771 = sbr.rel (0) target = $region49
  $region48: #{tpu_custom_call.1} parent=0 // pred_region
    _
  $region49: #{tpu_custom_call.1} parent=0 // pred_fallthru
    _

</llo_original>
